<compile_context>
chip_gen: v6e
topology: v6e:2x2x1
jax: 0.10.0
libtpu: 0.0.40
codegen_flags: <defaults>
</compile_context>

<pallas_src>
import functools

import jax
import jax.numpy as jnp
from jax import lax
from jax.experimental import pallas as pl
from jax.experimental.pallas import tpu as pltpu


def _round_up(x, m):
    return ((x + m - 1) // m) * m


def _softplus(x):
    # PyTorch nn.Softplus(beta=1, threshold=20): x if x > 20 else log(1+exp(x)).
    safe = jnp.minimum(x, 20.0)
    return jnp.where(x > 20.0, x, jnp.log1p(jnp.exp(safe)))


def _factor_encoder_kernel(e_ref, y_ref, w_pf_ref, b_pf_ref,
                           w_map_ref, b_map_ref, out_ref, *, K):
    TB, N, H = e_ref.shape
    M = w_pf_ref.shape[1]

    # --- Portfolio layer: one dense (TB*N, H) @ (H, M) MXU matmul. ----------
    # With N == 8 (a full sublane tile) this reshape is layout-preserving.
    e2 = e_ref[...].reshape(TB * N, H)
    logits = jnp.dot(e2, w_pf_ref[...],
                     preferred_element_type=jnp.float32) + b_pf_ref[...]
    logits = logits.reshape(TB, N, M)                            # (TB, N, M)

    # --- Softmax over the stock axis N (torch Softmax(dim=1) on (B,N,M)). ---
    m = jnp.max(logits, axis=1, keepdims=True)
    ex = jnp.exp(logits - m)
    denom = jnp.sum(ex, axis=1, keepdims=True)                   # (TB, 1, M)
    # EUP approximate reciprocal + one Newton-Raphson refinement: no VPU divide
    # sequence, ~f32 accuracy retained.
    r = pl.reciprocal(denom, approx=True)
    r = r * (2.0 - denom * r)
    a = ex * r                                                   # (TB, N, M)

    # --- y_p = einsum('bn,bnm->bm'): VPU multiply + cross-sublane reduce. ---
    y3 = y_ref[...]                                              # (TB, N, 1)
    y_p = jnp.sum(y3 * a, axis=1)                                # (TB, M)

    # --- Fused mapping layer: single (TB, M) @ (M, 2K) matmul. --------------
    z = jnp.dot(y_p, w_map_ref[...],
                preferred_element_type=jnp.float32) + b_map_ref[...]  # (TB, 2K)
    lane = lax.broadcasted_iota(jnp.int32, z.shape, 1)
    # Lanes [0, K) are mu_post; lanes [K, 2K) are softplus(sigma logits).
    out_ref[...] = jnp.where(lane < K, z, _softplus(z)).astype(out_ref.dtype)


def factor_encoder(e, y, params, *, tb=128):
    """e: (B, N, H) f32, y: (B, N) f32 -> (mu_post (B, K), sigma_post (B, K))."""
    w_pf, b_pf, w_mu, b_mu, w_sg, b_sg = params
    B, N, H = e.shape
    M = w_pf.shape[1]
    K = w_mu.shape[1]

    # Fuse the mean/std heads: one matmul, one lane-dense output slab.
    w_map = jnp.concatenate([w_mu, w_sg], axis=1)                # (M, 2K)
    b_map = jnp.concatenate([b_mu, b_sg], axis=1)                # (1, 2K)

    # Batch tile: sublane-aligned and capped at `tb`. tb=128 keeps the
    # double-buffered e block (2 * TB*N*H*4 B) tiny even under v7x's 64 MiB VMEM.
    TB = min(_round_up(tb, 8), _round_up(B, 8))
    B_pad = _round_up(B, TB)
    if B_pad != B:
        e = jnp.pad(e, ((0, B_pad - B), (0, 0), (0, 0)))
        y = jnp.pad(y, ((0, B_pad - B), (0, 0)))
    # Feed y as (B_pad, N, 1) so the in-kernel broadcast against a (TB, N, M)
    # tensor is a cheap lane broadcast (no lane->sublane relayout).
    y3 = y.reshape(B_pad, N, 1)

    full = lambda shape: pl.BlockSpec(shape, lambda i: (0,) * len(shape))

    out = pl.pallas_call(
        functools.partial(_factor_encoder_kernel, K=K),
        out_shape=jax.ShapeDtypeStruct((B_pad, 2 * K), jnp.float32),
        grid=(B_pad // TB,),
        in_specs=[
            pl.BlockSpec((TB, N, H), lambda i: (i, 0, 0)),   # e
            pl.BlockSpec((TB, N, 1), lambda i: (i, 0, 0)),   # y
            full((H, M)),                                    # w_pf
            full((1, M)),                                    # b_pf
            full((M, 2 * K)),                                # w_mu | w_sg
            full((1, 2 * K)),                                # b_mu | b_sg
        ],
        out_specs=pl.BlockSpec((TB, 2 * K), lambda i: (i, 0)),
        compiler_params=pltpu.CompilerParams(
            dimension_semantics=("parallel",)),
    )(e, y3, w_pf, b_pf, w_map, b_map)

    return out[:B, :K], out[:B, K:]


def reference(e, y, params):
    w_pf, b_pf, w_mu, b_mu, w_sg, b_sg = params
    logits = jnp.einsum('bnh,hm->bnm', e, w_pf) + b_pf[None]     # (B, N, M)
    a = jax.nn.softmax(logits, axis=1)                           # softmax over N
    y_p = jnp.einsum('bn,bnm->bm', y, a)                         # (B, M)
    mu = y_p @ w_mu + b_mu
    sg = jax.nn.softplus(y_p @ w_sg + b_sg)
    return mu, sg


if __name__ == "__main__":
    B, N, H, M, K = 2, 8, 32, 16, 4

    key = jax.random.PRNGKey(0)
    ke, ky, k1, k2, k3, k4, k5, k6 = jax.random.split(key, 8)

    e = jax.random.normal(ke, (B, N, H), dtype=jnp.float32)
    y = jax.random.normal(ky, (B, N), dtype=jnp.float32)

    # Deterministic parameter init (uniform, roughly matching nn.Linear scale).
    def init_w(k, fan_in, shape):
        bound = 1.0 / jnp.sqrt(fan_in)
        return jax.random.uniform(k, shape, jnp.float32, -bound, bound)

    params = (
        init_w(k1, H, (H, M)),      # pf_layer Linear(H, M) weight (stored in,out)
        init_w(k2, H, (1, M)),      # pf_layer bias
        init_w(k3, M, (M, K)),      # mean_layer Linear(M, K) weight
        init_w(k4, M, (1, K)),      # mean_layer bias
        init_w(k5, M, (M, K)),      # std_layer Linear(M, K) weight
        init_w(k6, M, (1, K)),      # std_layer bias
    )

    mu_post, sigma_post = factor_encoder(e, y, params)
    jax.block_until_ready((mu_post, sigma_post))

    mu_ref, sg_ref = reference(e, y, params)
    assert mu_post.shape == (B, K) and sigma_post.shape == (B, K)
    # Tolerance covers MXU f32 accumulation + EUP approx-reciprocal (with one
    # Newton-Raphson refinement the residual error is well below this bound).
    assert jnp.allclose(mu_post, mu_ref, atol=1e-3, rtol=1e-3)
    assert jnp.allclose(sigma_post, sg_ref, atol=1e-3, rtol=1e-3)

    print("KERNEL_OK")
</pallas_src>

<mosaic_0001>
module attributes {stable_mosaic.version = 11 : i64} {
  func.func @_factor_encoder_kernel(%arg0: i32, %arg1: memref<8x8x32xf32, #tpu.memory_space<vmem>>, %arg2: memref<8x8x1xf32, #tpu.memory_space<vmem>>, %arg3: memref<32x16xf32, #tpu.memory_space<vmem>>, %arg4: memref<1x16xf32, #tpu.memory_space<vmem>>, %arg5: memref<16x8xf32, #tpu.memory_space<vmem>>, %arg6: memref<1x8xf32, #tpu.memory_space<vmem>>, %arg7: memref<8x8xf32, #tpu.memory_space<vmem>>) attributes {dimension_semantics = [#tpu.dimension_semantics<parallel>], iteration_bounds = array<i64: 1>, scalar_prefetch = 0 : i64, scratch_operands = 0 : i64, tpu.core_type = #tpu.core_type<tc>, window_params = [{transform_indices = @transform_0, window_bounds = array<i64: 8, 8, 32>}, {transform_indices = @transform_1, window_bounds = array<i64: 8, 8, 1>}, {pipeline_mode = #tpu.pipeline_mode<synchronous>, transform_indices = @transform_2, window_bounds = array<i64: 32, 16>}, {pipeline_mode = #tpu.pipeline_mode<synchronous>, transform_indices = @transform_3, window_bounds = array<i64: 1, 16>}, {pipeline_mode = #tpu.pipeline_mode<synchronous>, transform_indices = @transform_4, window_bounds = array<i64: 16, 8>}, {pipeline_mode = #tpu.pipeline_mode<synchronous>, transform_indices = @transform_5, window_bounds = array<i64: 1, 8>}, {transform_indices = @transform_6, window_bounds = array<i64: 8, 8>}]} {
    %c0 = arith.constant 0 : index
    %c0_0 = arith.constant 0 : index
    %c0_1 = arith.constant 0 : index
    %0 = vector.load %arg1[%c0, %c0_0, %c0_1] : memref<8x8x32xf32, #tpu.memory_space<vmem>>, vector<8x8x32xf32>
    %1 = vector.shape_cast %0 : vector<8x8x32xf32> to vector<64x32xf32>
    %c0_2 = arith.constant 0 : index
    %c0_3 = arith.constant 0 : index
    %2 = vector.load %arg3[%c0_2, %c0_3] : memref<32x16xf32, #tpu.memory_space<vmem>>, vector<32x16xf32>
    %cst = arith.constant dense<0.000000e+00> : vector<64x16xf32>
    %3 = tpu.matmul %1, %2, %cst {dimension_numbers = #tpu.dot_dimension_numbers<[1], [0], [0], [1], [0, 0, 1, 1], [], []>} : vector<64x32xf32>, vector<32x16xf32>, vector<64x16xf32> -> vector<64x16xf32>
    %c0_4 = arith.constant 0 : index
    %c0_5 = arith.constant 0 : index
    %4 = vector.load %arg4[%c0_4, %c0_5] : memref<1x16xf32, #tpu.memory_space<vmem>>, vector<1x16xf32>
    %5 = vector.broadcast %4 : vector<1x16xf32> to vector<64x16xf32>
    %6 = arith.addf %3, %5 : vector<64x16xf32>
    %7 = vector.shape_cast %6 : vector<64x16xf32> to vector<8x8x16xf32>
    %cst_6 = arith.constant dense<0xFF800000> : vector<8x16xf32>
    %8 = vector.multi_reduction <maximumf>, %7, %cst_6 [1] : vector<8x8x16xf32> to vector<8x16xf32>
    %9 = vector.shape_cast %8 : vector<8x16xf32> to vector<8x1x16xf32>
    %10 = vector.broadcast %9 : vector<8x1x16xf32> to vector<8x8x16xf32>
    %11 = arith.subf %7, %10 : vector<8x8x16xf32>
    %12 = math.exp %11 : vector<8x8x16xf32>
    %cst_7 = arith.constant dense<0.000000e+00> : vector<8x16xf32>
    %13 = vector.multi_reduction <add>, %12, %cst_7 [1] : vector<8x8x16xf32> to vector<8x16xf32>
    %14 = vector.shape_cast %13 : vector<8x16xf32> to vector<8x1x16xf32>
    %15 = tpu.reciprocal %14 {approx = true} : vector<8x1x16xf32> -> vector<8x1x16xf32>
    %16 = arith.mulf %14, %15 : vector<8x1x16xf32>
    %cst_8 = arith.constant 2.000000e+00 : f32
    %17 = vector.broadcast %cst_8 : f32 to vector<8x1x16xf32>
    %18 = arith.subf %17, %16 : vector<8x1x16xf32>
    %19 = arith.mulf %15, %18 : vector<8x1x16xf32>
    %20 = vector.broadcast %19 : vector<8x1x16xf32> to vector<8x8x16xf32>
    %21 = arith.mulf %12, %20 : vector<8x8x16xf32>
    %c0_9 = arith.constant 0 : index
    %c0_10 = arith.constant 0 : index
    %c0_11 = arith.constant 0 : index
    %22 = vector.load %arg2[%c0_9, %c0_10, %c0_11] : memref<8x8x1xf32, #tpu.memory_space<vmem>>, vector<8x8x1xf32>
    %23 = vector.broadcast %22 : vector<8x8x1xf32> to vector<8x8x16xf32>
    %24 = arith.mulf %23, %21 : vector<8x8x16xf32>
    %cst_12 = arith.constant dense<0.000000e+00> : vector<8x16xf32>
    %25 = vector.multi_reduction <add>, %24, %cst_12 [1] : vector<8x8x16xf32> to vector<8x16xf32>
    %c0_13 = arith.constant 0 : index
    %c0_14 = arith.constant 0 : index
    %26 = vector.load %arg5[%c0_13, %c0_14] : memref<16x8xf32, #tpu.memory_space<vmem>>, vector<16x8xf32>
    %cst_15 = arith.constant dense<0.000000e+00> : vector<8x8xf32>
    %27 = tpu.matmul %25, %26, %cst_15 {dimension_numbers = #tpu.dot_dimension_numbers<[1], [0], [0], [1], [0, 0, 1, 1], [], []>} : vector<8x16xf32>, vector<16x8xf32>, vector<8x8xf32> -> vector<8x8xf32>
    %c0_16 = arith.constant 0 : index
    %c0_17 = arith.constant 0 : index
    %28 = vector.load %arg6[%c0_16, %c0_17] : memref<1x8xf32, #tpu.memory_space<vmem>>, vector<1x8xf32>
    %29 = vector.broadcast %28 : vector<1x8xf32> to vector<8x8xf32>
    %30 = arith.addf %27, %29 : vector<8x8xf32>
    %31 = tpu.iota {dimensions = array<i32: 1>} : vector<8x8xi32>
    %c4_i32 = arith.constant 4 : i32
    %32 = vector.broadcast %c4_i32 : i32 to vector<8x8xi32>
    %33 = arith.cmpi slt, %31, %32 : vector<8x8xi32>
    %cst_18 = arith.constant 2.000000e+01 : f32
    %34 = vector.broadcast %cst_18 : f32 to vector<8x8xf32>
    %35 = arith.minimumf %30, %34 : vector<8x8xf32>
    %cst_19 = arith.constant 2.000000e+01 : f32
    %36 = vector.broadcast %cst_19 : f32 to vector<8x8xf32>
    %37 = arith.cmpf ogt, %30, %36 : vector<8x8xf32>
    %38 = math.exp %35 : vector<8x8xf32>
    %39 = math.log1p %38 : vector<8x8xf32>
    %40 = arith.select %37, %30, %39 : vector<8x8xi1>, vector<8x8xf32>
    %41 = arith.select %33, %30, %40 : vector<8x8xi1>, vector<8x8xf32>
    %c0_20 = arith.constant 0 : index
    %c0_21 = arith.constant 0 : index
    %42 = vector.load %arg7[%c0_20, %c0_21] : memref<8x8xf32, #tpu.memory_space<vmem>>, vector<8x8xf32>
    tpu.vector_store %arg7[%c0_20, %c0_21], %41 {strides = array<i32>} : memref<8x8xf32, #tpu.memory_space<vmem>>, vector<8x8xf32>,
    return
  }
  func.func @transform_0(%arg0: i32) -> (i32, i32, i32) {
    %c0_i32 = arith.constant 0 : i32
    %c0_i32_0 = arith.constant 0 : i32
    %c0_i32_1 = arith.constant 0 : i32
    return %arg0, %c0_i32, %c0_i32_0 : i32, i32, i32
  }
  func.func @transform_1(%arg0: i32) -> (i32, i32, i32) {
    %c0_i32 = arith.constant 0 : i32
    %c0_i32_0 = arith.constant 0 : i32
    %c0_i32_1 = arith.constant 0 : i32
    return %arg0, %c0_i32, %c0_i32_0 : i32, i32, i32
  }
  func.func @transform_2(%arg0: i32) -> (i32, i32) {
    %c0_i32 = arith.constant 0 : i32
    %c0_i32_0 = arith.constant 0 : i32
    %c0_i32_1 = arith.constant 0 : i32
    return %c0_i32, %c0_i32_0 : i32, i32
  }
  func.func @transform_3(%arg0: i32) -> (i32, i32) {
    %c0_i32 = arith.constant 0 : i32
    %c0_i32_0 = arith.constant 0 : i32
    %c0_i32_1 = arith.constant 0 : i32
    return %c0_i32, %c0_i32_0 : i32, i32
  }
  func.func @transform_4(%arg0: i32) -> (i32, i32) {
    %c0_i32 = arith.constant 0 : i32
    %c0_i32_0 = arith.constant 0 : i32
    %c0_i32_1 = arith.constant 0 : i32
    return %c0_i32, %c0_i32_0 : i32, i32
  }
  func.func @transform_5(%arg0: i32) -> (i32, i32) {
    %c0_i32 = arith.constant 0 : i32
    %c0_i32_0 = arith.constant 0 : i32
    %c0_i32_1 = arith.constant 0 : i32
    return %c0_i32, %c0_i32_0 : i32, i32
  }
  func.func @transform_6(%arg0: i32) -> (i32, i32) {
    %c0_i32 = arith.constant 0 : i32
    %c0_i32_0 = arith.constant 0 : i32
    return %arg0, %c0_i32 : i32, i32
  }
}

</mosaic_0001>

<llo_original>
// kernel: tpu_custom_call.1
$region0: #{tpu_custom_call.1}
  #allocation0 [shape = 'u32[]', space=smem, size = 0x4, offset = 0x4, fixed_abs, tag = 'smem constant byte address 0x4 - core index']
  #allocation1 [shape = 'u32[144,128]{1,0:T(1,128)}', space=vmem, size = 0x12000, scoped, tag = 'internal scratch']
  %s0 = inlined_call_operand.vmem [shape: f32[8,8,32], index: 0, kind: input, shape index: {}]
  %s1 = inlined_call_operand.vmem [shape: f32[8,8,1], index: 1, kind: input, shape index: {}]
  %s2 = inlined_call_operand.vmem [shape: f32[32,16], index: 2, kind: input, shape index: {}]
  %s3 = inlined_call_operand.vmem [shape: f32[1,16], index: 3, kind: input, shape index: {}]
  %s4 = inlined_call_operand.vmem [shape: f32[16,8], index: 4, kind: input, shape index: {}]
  %s5 = inlined_call_operand.vmem [shape: f32[1,8], index: 5, kind: input, shape index: {}]
  %s6 = inlined_call_operand.hbm [shape: f32[8,8], index: 6, kind: output, shape index: {}]
  %s7 = sld [smem:[#allocation0]]
  $region34: #{tpu_custom_call.1} parent=0
    _
  %s9 = ssub.s32 1, %s7
  %s10 = scalar_select 0, %s9, %s7
  $region1: #{tpu_custom_call.1} parent=0
    #allocation2 [shape = 'u8[4096]{0}', space=vmem, size = 0x1000, scoped, tag = 'output window, operand 0, single buffered']
    #allocation3 [shape = 's32[1]{0}', space=sflag, size = 0x4, scoped, tag = 'scoped memory for tpu_custom_call.1']
    %11 = vsyncpa [#allocation3], 0
    // Predicated region
    $region2: #{tpu_custom_call.1} parent=1 // pred_check
      _
    $region3: #{tpu_custom_call.1} parent=1 // pred_check_branch
      %13 = sbr.rel (0) target = $region5
    $region4: #{tpu_custom_call.1} parent=1 // pred_region
      _
    $region5: #{tpu_custom_call.1} parent=1 // pred_fallthru
      _
    // Predicated region
    $region6: #{tpu_custom_call.1} parent=1 // pred_check
      _
    $region7: #{tpu_custom_call.1} parent=1 // pred_check_branch
      %15 = sbr.rel (0) target = $region9
    $region8: #{tpu_custom_call.1} parent=1 // pred_region
      _
    $region9: #{tpu_custom_call.1} parent=1 // pred_fallthru
      _
    // Predicated region
    $region10: #{tpu_custom_call.1} parent=1 // pred_check
      _
    $region11: #{tpu_custom_call.1} parent=1 // pred_check_branch
      %17 = sbr.rel (0) target = $region13
    $region12: #{tpu_custom_call.1} parent=1 // pred_region
      _
    $region13: #{tpu_custom_call.1} parent=1 // pred_fallthru
      _
    // Predicated region
    $region14: #{tpu_custom_call.1} parent=1 // pred_check
      _
    $region15: #{tpu_custom_call.1} parent=1 // pred_check_branch
      %19 = sbr.rel (0) target = $region17
    $region16: #{tpu_custom_call.1} parent=1 // pred_region
      _
    $region17: #{tpu_custom_call.1} parent=1 // pred_fallthru
      _
    // Predicated region
    $region18: #{tpu_custom_call.1} parent=1 // pred_check
      _
    $region19: #{tpu_custom_call.1} parent=1 // pred_check_branch
      %21 = sbr.rel (0) target = $region21
    $region20: #{tpu_custom_call.1} parent=1 // pred_region
      _
    $region21: #{tpu_custom_call.1} parent=1 // pred_fallthru
      _
    // Predicated region
    $region22: #{tpu_custom_call.1} parent=1 // pred_check
      _
    $region23: #{tpu_custom_call.1} parent=1 // pred_check_branch
      %23 = sbr.rel (0) target = $region25
    $region24: #{tpu_custom_call.1} parent=1 // pred_region
      _
    $region25: #{tpu_custom_call.1} parent=1 // pred_fallthru
      _
    %v24 = vld [vmem:[%s0] sm:$0xff]
    %v25 = vld [vmem:[%s0 + $0x8] sm:$0xff]
    %v26 = vld [vmem:[%s0 + $0x10] sm:$0xff]
    %v27 = vld [vmem:[%s0 + $0x18] sm:$0xff]
    %v28 = vld [vmem:[%s0 + $0x20] sm:$0xff]
    %v29 = vld [vmem:[%s0 + $0x28] sm:$0xff]
    %v30 = vld [vmem:[%s0 + $0x30] sm:$0xff]
    %v31 = vld [vmem:[%s0 + $0x38] sm:$0xff]
    %v32 = vld [vmem:[%s2] sm:$0xff]
    %v33 = vld [vmem:[%s2 + $0x8] sm:$0xff]
    %v34 = vld [vmem:[%s2 + $0x10] sm:$0xff]
    %v35 = vld [vmem:[%s2 + $0x18] sm:$0xff]
    %v36 = vld [vmem:[%s3] sm:$0x1]
    %v38 = vlaneseq
    %v39 = vshrl.u32 %v38, 7
    %v40 = vsub.s32 0, %v39
    %v41 = vrot.slane %v36, %v40
    %vm43 = vcmask 261120
    %v45 = vsel %vm43, %v24, 0
    %v48 = vsel %vm43, %v25, 0
    %v51 = vsel %vm43, %v26, 0
    %v54 = vsel %vm43, %v27, 0
    %v57 = vsel %vm43, %v28, 0
    %v60 = vsel %vm43, %v29, 0
    %v63 = vsel %vm43, %v30, 0
    %v66 = vsel %vm43, %v31, 0
    %68 = vmatprep.subr.mxu0 0.0
    %69 = vmatpush1.msra.mxu0 0.0
    %70 = vmatprep.subr.mxu0 0.0
    %71 = vmatpush1.msra.mxu0 0.0
    %72 = vmatprep.subr.mxu0 0.0
    %73 = vmatpush1.msra.mxu0 0.0
    %74 = vmatprep.subr.mxu0 0.0
    %75 = vmatpush1.msra.mxu0 0.0
    %76 = vmatprep.subr.mxu0 0.0
    %77 = vmatpush1.msra.mxu0 0.0
    %78 = vmatprep.subr.mxu0 0.0
    %79 = vmatpush1.msra.mxu0 0.0
    %80 = vmatprep.subr.mxu0 0.0
    %81 = vmatpush1.msra.mxu0 0.0
    %82 = vmatprep.subr.mxu0 0.0
    %83 = vmatpush1.msra.mxu0 0.0
    %84 = vmatprep.subr.mxu0 0.0
    %85 = vmatpush1.msra.mxu0 0.0
    %86 = vmatprep.subr.mxu0 0.0
    %87 = vmatpush1.msra.mxu0 0.0
    %88 = vmatprep.subr.mxu0 0.0
    %89 = vmatpush1.msra.mxu0 0.0
    %90 = vmatprep.subr.mxu0 0.0
    %91 = vmatpush1.msra.mxu0 0.0
    %92 = vmatprep.subr.mxu0 0.0
    %93 = vmatpush1.msra.mxu0 %v35
    %94 = vmatprep.subr.mxu0 0.0
    %95 = vmatpush1.msra.mxu0 %v34
    %96 = vmatprep.subr.mxu0 0.0
    %97 = vmatpush1.msra.mxu0 %v33
    %98 = vmatprep.subr.mxu0 0.0
    %99 = vmatpush1.msra.mxu0 %v32
    %100 = vmatprep.subr.mxu0 0.0
    %101 = vmatpush2.msra.mxu0 0.0
    %102 = vmatprep.subr.mxu0 0.0
    %103 = vmatpush2.msra.mxu0 0.0
    %104 = vmatprep.subr.mxu0 0.0
    %105 = vmatpush2.msra.mxu0 0.0
    %106 = vmatprep.subr.mxu0 0.0
    %107 = vmatpush2.msra.mxu0 0.0
    %108 = vmatprep.subr.mxu0 0.0
    %109 = vmatpush2.msra.mxu0 0.0
    %110 = vmatprep.subr.mxu0 0.0
    %111 = vmatpush2.msra.mxu0 0.0
    %112 = vmatprep.subr.mxu0 0.0
    %113 = vmatpush2.msra.mxu0 0.0
    %114 = vmatprep.subr.mxu0 0.0
    %115 = vmatpush2.msra.mxu0 0.0
    %116 = vmatprep.subr.mxu0 0.0
    %117 = vmatpush2.msra.mxu0 0.0
    %118 = vmatprep.subr.mxu0 0.0
    %119 = vmatpush2.msra.mxu0 0.0
    %120 = vmatprep.subr.mxu0 0.0
    %121 = vmatpush2.msra.mxu0 0.0
    %122 = vmatprep.subr.mxu0 0.0
    %123 = vmatpush2.msra.mxu0 0.0
    %124 = vmatprep.subr.mxu0 0.0
    %125 = vmatpush2.msra.mxu0 0.0
    %126 = vmatprep.subr.mxu0 0.0
    %127 = vmatpush2.msra.mxu0 0.0
    %128 = vmatprep.subr.mxu0 0.0
    %129 = vmatpush2.msra.mxu0 0.0
    %130 = vmatprep.subr.mxu0 0.0
    %131 = vmatpush2.msra.mxu0 0.0
    %132 = vmatprep.mubr.f32.mxu0 0.0
    %133 = vmatmul.mubr.f32.gmra.mxu0 %v45
    %v134 = vpop.f32.mrf.mxu0
    %v135 = vadd.f32 %v41, %v134
    %v136 = vpop.f32.mrf.mxu0
    %137 = vmatprep.mubr.f32.mxu0 0.0
    %138 = vmatmul.mubr.f32.gmra.mxu0 %v48
    %v139 = vpop.f32.mrf.mxu0
    %v140 = vadd.f32 %v41, %v139
    %v141 = vpop.f32.mrf.mxu0
    %142 = vmatprep.mubr.f32.mxu0 0.0
    %143 = vmatmul.mubr.f32.gmra.mxu0 %v51
    %v144 = vpop.f32.mrf.mxu0
    %v145 = vadd.f32 %v41, %v144
    %v146 = vpop.f32.mrf.mxu0
    %147 = vmatprep.mubr.f32.mxu0 0.0
    %148 = vmatmul.mubr.f32.gmra.mxu0 %v54
    %v149 = vpop.f32.mrf.mxu0
    %v150 = vadd.f32 %v41, %v149
    %v151 = vpop.f32.mrf.mxu0
    %152 = vmatprep.mubr.f32.mxu0 0.0
    %153 = vmatmul.mubr.f32.gmra.mxu0 %v57
    %v154 = vpop.f32.mrf.mxu0
    %v155 = vadd.f32 %v41, %v154
    %v156 = vpop.f32.mrf.mxu0
    %157 = vmatprep.mubr.f32.mxu0 0.0
    %158 = vmatmul.mubr.f32.gmra.mxu0 %v60
    %v159 = vpop.f32.mrf.mxu0
    %v160 = vadd.f32 %v41, %v159
    %v161 = vpop.f32.mrf.mxu0
    %162 = vmatprep.mubr.f32.mxu0 0.0
    %163 = vmatmul.mubr.f32.gmra.mxu0 %v63
    %v164 = vpop.f32.mrf.mxu0
    %v165 = vadd.f32 %v41, %v164
    %v166 = vpop.f32.mrf.mxu0
    %167 = vmatprep.mubr.f32.mxu0 0.0
    %168 = vmatmul.mubr.f32.gmra.mxu0 %v66
    %v169 = vpop.f32.mrf.mxu0
    %v170 = vadd.f32 %v41, %v169
    %v171 = vpop.f32.mrf.mxu0
    %172 = vdwg.mxu0
    %vm173 = vcmask 130048
    %v174 = vsel %vm173, %v135, -inf
    %v175 = vrot.slane %v174, 4
    %v176 = vmax.f32 %v174, %v175
    %v177 = vrot.slane %v176, 2
    %v178 = vmax.f32 %v176, %v177
    %v179 = vrot.slane %v178, 1
    %v180 = vmax.f32 %v178, %v179
    %v181 = vsel %vm173, %v140, -inf
    %v182 = vrot.slane %v181, 4
    %v183 = vmax.f32 %v181, %v182
    %v184 = vrot.slane %v183, 2
    %v185 = vmax.f32 %v183, %v184
    %v186 = vrot.slane %v185, 1
    %v187 = vmax.f32 %v185, %v186
    %v188 = vsel %vm173, %v145, -inf
    %v189 = vrot.slane %v188, 4
    %v190 = vmax.f32 %v188, %v189
    %v191 = vrot.slane %v190, 2
    %v192 = vmax.f32 %v190, %v191
    %v193 = vrot.slane %v192, 1
    %v194 = vmax.f32 %v192, %v193
    %v195 = vsel %vm173, %v150, -inf
    %v196 = vrot.slane %v195, 4
    %v197 = vmax.f32 %v195, %v196
    %v198 = vrot.slane %v197, 2
    %v199 = vmax.f32 %v197, %v198
    %v200 = vrot.slane %v199, 1
    %v201 = vmax.f32 %v199, %v200
    %v202 = vsel %vm173, %v155, -inf
    %v203 = vrot.slane %v202, 4
    %v204 = vmax.f32 %v202, %v203
    %v205 = vrot.slane %v204, 2
    %v206 = vmax.f32 %v204, %v205
    %v207 = vrot.slane %v206, 1
    %v208 = vmax.f32 %v206, %v207
    %v209 = vsel %vm173, %v160, -inf
    %v210 = vrot.slane %v209, 4
    %v211 = vmax.f32 %v209, %v210
    %v212 = vrot.slane %v211, 2
    %v213 = vmax.f32 %v211, %v212
    %v214 = vrot.slane %v213, 1
    %v215 = vmax.f32 %v213, %v214
    %v216 = vsel %vm173, %v165, -inf
    %v217 = vrot.slane %v216, 4
    %v218 = vmax.f32 %v216, %v217
    %v219 = vrot.slane %v218, 2
    %v220 = vmax.f32 %v218, %v219
    %v221 = vrot.slane %v220, 1
    %v222 = vmax.f32 %v220, %v221
    %v223 = vsel %vm173, %v170, -inf
    %v224 = vrot.slane %v223, 4
    %v225 = vmax.f32 %v223, %v224
    %v226 = vrot.slane %v225, 2
    %v227 = vmax.f32 %v225, %v226
    %v228 = vrot.slane %v227, 1
    %v229 = vmax.f32 %v227, %v228
    %v230 = vsub.f32 %v135, %v180
    %v231 = vsub.f32 %v140, %v187
    %v232 = vsub.f32 %v145, %v194
    %v233 = vsub.f32 %v150, %v201
    %v234 = vsub.f32 %v155, %v208
    %v235 = vsub.f32 %v160, %v215
    %v236 = vsub.f32 %v165, %v222
    %v237 = vsub.f32 %v170, %v229
    %v238 = vmul.f32 %v230, 1.442695
    %v239 = vpow.pop %v238
    %v240 = vmul.f32 %v231, 1.442695
    %v241 = vpow.pop %v240
    %v242 = vmul.f32 %v232, 1.442695
    %v243 = vpow.pop %v242
    %v244 = vmul.f32 %v233, 1.442695
    %v245 = vpow.pop %v244
    %v246 = vmul.f32 %v234, 1.442695
    %v247 = vpow.pop %v246
    %v248 = vmul.f32 %v235, 1.442695
    %v249 = vpow.pop %v248
    %v250 = vmul.f32 %v236, 1.442695
    %v251 = vpow.pop %v250
    %v252 = vmul.f32 %v237, 1.442695
    %v253 = vpow.pop %v252
    %v254 = vsel %vm173, %v239, 0.0
    %v255 = vrot.slane %v254, 4
    %v256 = vadd.f32 %v254, %v255
    %v257 = vrot.slane %v256, 2
    %v258 = vadd.f32 %v256, %v257
    %v259 = vrot.slane %v258, 1
    %v260 = vadd.f32 %v258, %v259
    %v261 = vsel %vm173, %v241, 0.0
    %v262 = vrot.slane %v261, 4
    %v263 = vadd.f32 %v261, %v262
    %v264 = vrot.slane %v263, 2
    %v265 = vadd.f32 %v263, %v264
    %v266 = vrot.slane %v265, 1
    %v267 = vadd.f32 %v265, %v266
    %v268 = vsel %vm173, %v243, 0.0
    %v269 = vrot.slane %v268, 4
    %v270 = vadd.f32 %v268, %v269
    %v271 = vrot.slane %v270, 2
    %v272 = vadd.f32 %v270, %v271
    %v273 = vrot.slane %v272, 1
    %v274 = vadd.f32 %v272, %v273
    %v275 = vsel %vm173, %v245, 0.0
    %v276 = vrot.slane %v275, 4
    %v277 = vadd.f32 %v275, %v276
    %v278 = vrot.slane %v277, 2
    %v279 = vadd.f32 %v277, %v278
    %v280 = vrot.slane %v279, 1
    %v281 = vadd.f32 %v279, %v280
    %v282 = vsel %vm173, %v247, 0.0
    %v283 = vrot.slane %v282, 4
    %v284 = vadd.f32 %v282, %v283
    %v285 = vrot.slane %v284, 2
    %v286 = vadd.f32 %v284, %v285
    %v287 = vrot.slane %v286, 1
    %v288 = vadd.f32 %v286, %v287
    %v289 = vsel %vm173, %v249, 0.0
    %v290 = vrot.slane %v289, 4
    %v291 = vadd.f32 %v289, %v290
    %v292 = vrot.slane %v291, 2
    %v293 = vadd.f32 %v291, %v292
    %v294 = vrot.slane %v293, 1
    %v295 = vadd.f32 %v293, %v294
    %v296 = vsel %vm173, %v251, 0.0
    %v297 = vrot.slane %v296, 4
    %v298 = vadd.f32 %v296, %v297
    %v299 = vrot.slane %v298, 2
    %v300 = vadd.f32 %v298, %v299
    %v301 = vrot.slane %v300, 1
    %v302 = vadd.f32 %v300, %v301
    %v303 = vsel %vm173, %v253, 0.0
    %v304 = vrot.slane %v303, 4
    %v305 = vadd.f32 %v303, %v304
    %v306 = vrot.slane %v305, 2
    %v307 = vadd.f32 %v305, %v306
    %v308 = vrot.slane %v307, 1
    %v309 = vadd.f32 %v307, %v308
    %v310 = vrcp.pop %v260
    %v311 = vrcp.pop %v267
    %v312 = vrcp.pop %v274
    %v313 = vrcp.pop %v281
    %v314 = vrcp.pop %v288
    %v315 = vrcp.pop %v295
    %v316 = vrcp.pop %v302
    %v317 = vrcp.pop %v309
    %v318 = vmul.f32 %v260, %v310
    %v319 = vmul.f32 %v267, %v311
    %v320 = vmul.f32 %v274, %v312
    %v321 = vmul.f32 %v281, %v313
    %v322 = vmul.f32 %v288, %v314
    %v323 = vmul.f32 %v295, %v315
    %v324 = vmul.f32 %v302, %v316
    %v325 = vmul.f32 %v309, %v317
    %v326 = vsub.f32 2.0, %v318
    %v327 = vsub.f32 2.0, %v319
    %v328 = vsub.f32 2.0, %v320
    %v329 = vsub.f32 2.0, %v321
    %v330 = vsub.f32 2.0, %v322
    %v331 = vsub.f32 2.0, %v323
    %v332 = vsub.f32 2.0, %v324
    %v333 = vsub.f32 2.0, %v325
    %v334 = vmul.f32 %v310, %v326
    %v335 = vmul.f32 %v311, %v327
    %v336 = vmul.f32 %v312, %v328
    %v337 = vmul.f32 %v313, %v329
    %v338 = vmul.f32 %v314, %v330
    %v339 = vmul.f32 %v315, %v331
    %v340 = vmul.f32 %v316, %v332
    %v341 = vmul.f32 %v317, %v333
    %v342 = vmul.f32 %v239, %v334
    %v343 = vmul.f32 %v241, %v335
    %v344 = vmul.f32 %v243, %v336
    %v345 = vmul.f32 %v245, %v337
    %v346 = vmul.f32 %v247, %v338
    %v347 = vmul.f32 %v249, %v339
    %v348 = vmul.f32 %v251, %v340
    %v349 = vmul.f32 %v253, %v341
    %v350 = vld [vmem:[%s1] sm:$0xff]
    %v351 = vld [vmem:[%s1 + $0x8] sm:$0xff]
    %v352 = vld [vmem:[%s1 + $0x10] sm:$0xff]
    %v353 = vld [vmem:[%s1 + $0x18] sm:$0xff]
    %v354 = vld [vmem:[%s1 + $0x20] sm:$0xff]
    %v355 = vld [vmem:[%s1 + $0x28] sm:$0xff]
    %v356 = vld [vmem:[%s1 + $0x30] sm:$0xff]
    %v357 = vld [vmem:[%s1 + $0x38] sm:$0xff]
    %359 = vset.pattern.permute.xlu0 0
    %360 = vperm.xlu0 %359, %v350
    %v361 = vpop.permute.xlu0 %360
    %364 = vset.pattern.permute.xlu0 0
    %365 = vperm.xlu0 %364, %v351
    %v366 = vpop.permute.xlu0 %365
    %369 = vset.pattern.permute.xlu0 0
    %370 = vperm.xlu0 %369, %v352
    %v371 = vpop.permute.xlu0 %370
    %374 = vset.pattern.permute.xlu0 0
    %375 = vperm.xlu0 %374, %v353
    %v376 = vpop.permute.xlu0 %375
    %379 = vset.pattern.permute.xlu0 0
    %380 = vperm.xlu0 %379, %v354
    %v381 = vpop.permute.xlu0 %380
    %384 = vset.pattern.permute.xlu0 0
    %385 = vperm.xlu0 %384, %v355
    %v386 = vpop.permute.xlu0 %385
    %389 = vset.pattern.permute.xlu0 0
    %390 = vperm.xlu0 %389, %v356
    %v391 = vpop.permute.xlu0 %390
    %394 = vset.pattern.permute.xlu0 0
    %395 = vperm.xlu0 %394, %v357
    %v396 = vpop.permute.xlu0 %395
    %v398 = vmul.f32 %v361, %v342
    %v399 = vmul.f32 %v366, %v343
    %v400 = vmul.f32 %v371, %v344
    %v401 = vmul.f32 %v376, %v345
    %v402 = vmul.f32 %v381, %v346
    %v403 = vmul.f32 %v386, %v347
    %v404 = vmul.f32 %v391, %v348
    %v405 = vmul.f32 %v396, %v349
    %v406 = vsel %vm173, %v398, 0.0
    %v407 = vrot.slane %v406, 4
    %v408 = vadd.f32 %v406, %v407
    %v409 = vrot.slane %v408, 2
    %v410 = vadd.f32 %v408, %v409
    %v411 = vrot.slane %v410, 1
    %v412 = vadd.f32 %v410, %v411
    %v413 = vsel %vm173, %v399, 0.0
    %v414 = vrot.slane %v413, 4
    %v415 = vadd.f32 %v413, %v414
    %v416 = vrot.slane %v415, 2
    %v417 = vadd.f32 %v415, %v416
    %v418 = vrot.slane %v417, 1
    %v419 = vadd.f32 %v417, %v418
    %v420 = vsel %vm173, %v400, 0.0
    %v421 = vrot.slane %v420, 4
    %v422 = vadd.f32 %v420, %v421
    %v423 = vrot.slane %v422, 2
    %v424 = vadd.f32 %v422, %v423
    %v425 = vrot.slane %v424, 1
    %v426 = vadd.f32 %v424, %v425
    %v427 = vsel %vm173, %v401, 0.0
    %v428 = vrot.slane %v427, 4
    %v429 = vadd.f32 %v427, %v428
    %v430 = vrot.slane %v429, 2
    %v431 = vadd.f32 %v429, %v430
    %v432 = vrot.slane %v431, 1
    %v433 = vadd.f32 %v431, %v432
    %v434 = vsel %vm173, %v402, 0.0
    %v435 = vrot.slane %v434, 4
    %v436 = vadd.f32 %v434, %v435
    %v437 = vrot.slane %v436, 2
    %v438 = vadd.f32 %v436, %v437
    %v439 = vrot.slane %v438, 1
    %v440 = vadd.f32 %v438, %v439
    %v441 = vsel %vm173, %v403, 0.0
    %v442 = vrot.slane %v441, 4
    %v443 = vadd.f32 %v441, %v442
    %v444 = vrot.slane %v443, 2
    %v445 = vadd.f32 %v443, %v444
    %v446 = vrot.slane %v445, 1
    %v447 = vadd.f32 %v445, %v446
    %v448 = vsel %vm173, %v404, 0.0
    %v449 = vrot.slane %v448, 4
    %v450 = vadd.f32 %v448, %v449
    %v451 = vrot.slane %v450, 2
    %v452 = vadd.f32 %v450, %v451
    %v453 = vrot.slane %v452, 1
    %v454 = vadd.f32 %v452, %v453
    %v455 = vsel %vm173, %v405, 0.0
    %v456 = vrot.slane %v455, 4
    %v457 = vadd.f32 %v455, %v456
    %v458 = vrot.slane %v457, 2
    %v459 = vadd.f32 %v457, %v458
    %v460 = vrot.slane %v459, 1
    %v461 = vadd.f32 %v459, %v460
    %v462 = vld [vmem:[%s4] sm:$0xff]
    %v463 = vld [vmem:[%s4 + $0x8] sm:$0xff]
    %v464 = vld [vmem:[%s5] sm:$0x1]
    %v466 = vlaneseq
    %v467 = vshrl.u32 %v466, 7
    %v468 = vsub.s32 0, %v467
    %v469 = vrot.slane %v464, %v468
    %vm479 = vcmask 1041409
    %v480 = vsel %vm479, %v419, %v412
    %vm481 = vcmask 1042434
    %v482 = vsel %vm481, %v426, %v480
    %vm483 = vcmask 1043459
    %v484 = vsel %vm483, %v433, %v482
    %vm485 = vcmask 1044484
    %v486 = vsel %vm485, %v440, %v484
    %vm487 = vcmask 1045509
    %v488 = vsel %vm487, %v447, %v486
    %vm489 = vcmask 1046534
    %v490 = vsel %vm489, %v454, %v488
    %vm491 = vcmask 1047559
    %v492 = vsel %vm491, %v461, %v490
    %v493 = vsel %vm173, %v492, 0
    %495 = vmatprep.subr.mxu0 0.0
    %496 = vmatpush1.msra.mxu0 0.0
    %497 = vmatprep.subr.mxu0 0.0
    %498 = vmatpush1.msra.mxu0 0.0
    %499 = vmatprep.subr.mxu0 0.0
    %500 = vmatpush1.msra.mxu0 0.0
    %501 = vmatprep.subr.mxu0 0.0
    %502 = vmatpush1.msra.mxu0 0.0
    %503 = vmatprep.subr.mxu0 0.0
    %504 = vmatpush1.msra.mxu0 0.0
    %505 = vmatprep.subr.mxu0 0.0
    %506 = vmatpush1.msra.mxu0 0.0
    %507 = vmatprep.subr.mxu0 0.0
    %508 = vmatpush1.msra.mxu0 0.0
    %509 = vmatprep.subr.mxu0 0.0
    %510 = vmatpush1.msra.mxu0 0.0
    %511 = vmatprep.subr.mxu0 0.0
    %512 = vmatpush1.msra.mxu0 0.0
    %513 = vmatprep.subr.mxu0 0.0
    %514 = vmatpush1.msra.mxu0 0.0
    %515 = vmatprep.subr.mxu0 0.0
    %516 = vmatpush1.msra.mxu0 0.0
    %517 = vmatprep.subr.mxu0 0.0
    %518 = vmatpush1.msra.mxu0 0.0
    %519 = vmatprep.subr.mxu0 0.0
    %520 = vmatpush1.msra.mxu0 0.0
    %521 = vmatprep.subr.mxu0 0.0
    %522 = vmatpush1.msra.mxu0 0.0
    %523 = vmatprep.subr.mxu0 0.0
    %524 = vmatpush1.msra.mxu0 %v463
    %525 = vmatprep.subr.mxu0 0.0
    %526 = vmatpush1.msra.mxu0 %v462
    %527 = vmatprep.subr.mxu0 0.0
    %528 = vmatpush2.msra.mxu0 0.0
    %529 = vmatprep.subr.mxu0 0.0
    %530 = vmatpush2.msra.mxu0 0.0
    %531 = vmatprep.subr.mxu0 0.0
    %532 = vmatpush2.msra.mxu0 0.0
    %533 = vmatprep.subr.mxu0 0.0
    %534 = vmatpush2.msra.mxu0 0.0
    %535 = vmatprep.subr.mxu0 0.0
    %536 = vmatpush2.msra.mxu0 0.0
    %537 = vmatprep.subr.mxu0 0.0
    %538 = vmatpush2.msra.mxu0 0.0
    %539 = vmatprep.subr.mxu0 0.0
    %540 = vmatpush2.msra.mxu0 0.0
    %541 = vmatprep.subr.mxu0 0.0
    %542 = vmatpush2.msra.mxu0 0.0
    %543 = vmatprep.subr.mxu0 0.0
    %544 = vmatpush2.msra.mxu0 0.0
    %545 = vmatprep.subr.mxu0 0.0
    %546 = vmatpush2.msra.mxu0 0.0
    %547 = vmatprep.subr.mxu0 0.0
    %548 = vmatpush2.msra.mxu0 0.0
    %549 = vmatprep.subr.mxu0 0.0
    %550 = vmatpush2.msra.mxu0 0.0
    %551 = vmatprep.subr.mxu0 0.0
    %552 = vmatpush2.msra.mxu0 0.0
    %553 = vmatprep.subr.mxu0 0.0
    %554 = vmatpush2.msra.mxu0 0.0
    %555 = vmatprep.subr.mxu0 0.0
    %556 = vmatpush2.msra.mxu0 0.0
    %557 = vmatprep.subr.mxu0 0.0
    %558 = vmatpush2.msra.mxu0 0.0
    %559 = vmatprep.mubr.f32.mxu0 0.0
    %560 = vmatmul.mubr.f32.gmra.mxu0 %v493
    %v561 = vpop.f32.mrf.mxu0
    %v562 = vadd.f32 %v469, %v561
    %v563 = vpop.f32.mrf.mxu0
    %564 = vdwg.mxu0
    %v565 = vlaneseq
    %v566 = vand.u32 %v565, 127
    %vm567 = vcmp.lt.s32.totalorder %v566, 4
    %v568 = vmin.f32 %v562, 20.0
    %vm569 = vcmp.gt.f32.partialorder %v562, 20.0
    %v570 = vmul.f32 %v568, 1.442695
    %v571 = vpow.pop %v570
    %v572 = vadd.f32 %v571, 1.0
    %v573 = vlog2.pop %v572
    %v574 = vmul.f32 %v573, 0.6931472
    %v575 = vmul.f32 -0.5, %v571
    %v576 = vadd.f32 %v575, 1.0
    %v577 = vmul.f32 %v576, %v571
    %v578 = vand.u32 2147483647, %v571
    %vm579 = vcmp.lt.f32.partialorder %v578, 0.0004427343
    %v580 = vsel %vm579, %v577, %v574
    %v581 = vsel %vm569, %v562, %v580
    %v582 = vsel %vm567, %v562, %v581
    %vm583 = vcmask 64512
    %584 = vst.msk [vmem:[#allocation2] sm:$0xff] %vm583, %v582
    // Predicated region
    $region26: #{tpu_custom_call.1} parent=1 // pred_check
      _
    $region27: #{tpu_custom_call.1} parent=1 // pred_check_branch
      %586 = sbr.rel (0) target = $region29
    $region28: #{tpu_custom_call.1} parent=1 // pred_region
      %s588 = ssub.s32 128, 128
      %589 = vsyncadd [#allocation3], %s588
      %s591 = sshll.u32 [#allocation2], 4
      %s592 = int_to_ptr.vmem [resolvable:$true] %s591
      %594 = dma.vmem_to_hbm [thread:$0]  %s592, 128, %s6, [#allocation3]
    $region29: #{tpu_custom_call.1} parent=1 // pred_fallthru
      _
    // Predicated region
    $region30: #{tpu_custom_call.1} parent=1 // pred_check
      _
    $region31: #{tpu_custom_call.1} parent=1 // pred_check_branch
      %596 = sbr.rel (0) target = $region33
    $region32: #{tpu_custom_call.1} parent=1 // pred_region
      %597 = dma.done [#allocation3], 128
    $region33: #{tpu_custom_call.1} parent=1 // pred_fallthru
      _
    %598 = vsyncpa [#allocation3], 1

</llo_original>
